<compile_context>
chip_gen: v5e
topology: v5e:2x2
jax: 0.10.0
libtpu: 0.0.40
codegen_flags: <defaults>
</compile_context>

<pallas_src>
import jax
import jax.numpy as jnp
from jax.experimental import pallas as pl
from jax.experimental.pallas import tpu as pltpu

LANE = 128            # batch elements per lane row
MAX_ROWS_TILE = 4096  # rows of 128 lanes per grid step (multiple of 8)


def mlp_kernel(params_ref, x_ref, o_ref):
    # params_ref: SMEM f32[9]:
    #   [w1_00, w1_01, w1_10, w1_11, b1_0, b1_1, w2_00, w2_01, b2_0]
    # x_ref: VMEM [2, rows_tile, 128]   (channel-major, batch dense on sublane+lane)
    # o_ref: VMEM [rows_tile, 128]      (dense output slab)

    # Hoist the 9 scalar reads + broadcasts once per block.
    w1_00 = params_ref[0]
    w1_01 = params_ref[1]
    w1_10 = params_ref[2]
    w1_11 = params_ref[3]
    b1_0 = params_ref[4]
    b1_1 = params_ref[5]
    w2_0 = params_ref[6]
    w2_1 = params_ref[7]
    b2_0 = params_ref[8]

    x0 = x_ref[0]  # [rows_tile, 128]
    x1 = x_ref[1]  # [rows_tile, 128]

    # fc1 + ReLU (pure VPU FMAs)
    h0 = jnp.maximum(x0 * w1_00 + x1 * w1_01 + b1_0, 0.0)
    h1 = jnp.maximum(x0 * w1_10 + x1 * w1_11 + b1_1, 0.0)

    # fc2
    o_ref[...] = h0 * w2_0 + h1 * w2_1 + b2_0


def pack_params(w1, b1, w2, b2):
    """Pack PyTorch-layout Linear params ([out,in] weights, [out] biases)
    into one flat f32[9] array. Do this ONCE at init, not per call."""
    return jnp.concatenate(
        [w1.reshape(-1), b1.reshape(-1), w2.reshape(-1), b2.reshape(-1)]
    ).astype(jnp.float32)


def net_forward(x, params):
    """Forward pass of Net.

    x:      [B, input_dim=2] float32 (PyTorch layout)
    params: f32[9] from pack_params(w1, b1, w2, b2)
    returns [B, out_put_dim=1] float32
    """
    B, d_in = x.shape
    assert d_in == 2, "kernel is specialized to input_dim=2 (module default)"

    # --- choose tiling -----------------------------------------------------
    rows = pl.cdiv(B, LANE)  # number of 128-lane rows needed
    if rows > MAX_ROWS_TILE:
        rows_tile = MAX_ROWS_TILE                       # big slabs, grid >= 2
    elif rows >= 16:
        rows_tile = ((pl.cdiv(rows, 2) + 7) // 8) * 8   # split into 2 blocks (megacore)
    else:
        rows_tile = ((rows + 7) // 8) * 8               # single small block
    num_blocks = pl.cdiv(rows, rows_tile)
    rows_pad = num_blocks * rows_tile
    b_pad = rows_pad * LANE

    # --- single fused layout pass: pad + transpose + reshape ---------------
    # [B,2] -> [b_pad,2] -> [2,b_pad] -> [2, rows_pad, 128]
    x_cm = (
        jnp.pad(x.astype(jnp.float32), ((0, b_pad - B), (0, 0)))
        .T.reshape(2, rows_pad, LANE)
    )

    out = pl.pallas_call(
        mlp_kernel,
        out_shape=jax.ShapeDtypeStruct((rows_pad, LANE), jnp.float32),
        grid=(num_blocks,),
        in_specs=[
            # all 9 parameter scalars in one SMEM-resident array (single DMA)
            pl.BlockSpec(memory_space=pltpu.MemorySpace.SMEM),
            # dense channel-major input slab
            pl.BlockSpec((2, rows_tile, LANE), lambda i: (0, i, 0)),
        ],
        out_specs=pl.BlockSpec((rows_tile, LANE), lambda i: (i, 0)),
        compiler_params=pltpu.CompilerParams(
            dimension_semantics=("parallel",),
            vmem_limit_bytes=32 * 1024 * 1024,
        ),
        cost_estimate=pl.CostEstimate(
            flops=14 * b_pad,          # 2x(2 mul + 2 add) + relu + (2 mul + 2 add)
            transcendentals=0,
            bytes_accessed=4 * (2 * b_pad + b_pad + 9),
        ),
    )(params, x_cm)

    # Back to PyTorch output layout [B, out_put_dim]; drop padded lanes.
    return out.reshape(b_pad)[:B].reshape(B, 1)


def net_forward_ref(x, w1, b1, w2, b2):
    # Pure-JAX reference (mirrors the PyTorch forward exactly).
    h = jnp.maximum(x @ w1.T + b1, 0.0)
    return h @ w2.T + b2


if __name__ == "__main__":
    input_dim = 2
    out_put_dim = 1

    key = jax.random.PRNGKey(0)
    kx, kw1, kb1, kw2, kb2 = jax.random.split(key, 5)

    # PyTorch Linear shapes: weights [out, in], biases [out].
    w1 = jax.random.normal(kw1, (2, input_dim), dtype=jnp.float32) * 0.5
    b1 = jax.random.normal(kb1, (2,), dtype=jnp.float32) * 0.1
    w2 = jax.random.normal(kw2, (out_put_dim, 2), dtype=jnp.float32) * 0.5
    b2 = jax.random.normal(kb2, (out_put_dim,), dtype=jnp.float32) * 0.1

    # Pack once (hoisted out of the per-call path).
    params = pack_params(w1, b1, w2, b2)

    ok = True
    # 8: tiny (padding path), 256: single block, 4096: 2 parallel blocks.
    for batch in (8, 256, 4096):
        x = jax.random.normal(kx, (batch, input_dim), dtype=jnp.float32)

        out = net_forward(x, params)
        jax.block_until_ready(out)

        ref = net_forward_ref(x, w1, b1, w2, b2)
        ok &= out.shape == (batch, out_put_dim)
        ok &= bool(jnp.allclose(out, ref, atol=1e-5, rtol=1e-5))

    assert ok
    print("KERNEL_OK")
</pallas_src>

<mosaic_0001>
module attributes {stable_mosaic.version = 11 : i64} {
  func.func @mlp_kernel(%arg0: i32, %arg1: memref<9xf32, #tpu.memory_space<smem>>, %arg2: memref<2x8x128xf32, #tpu.memory_space<vmem>>, %arg3: memref<8x128xf32, #tpu.memory_space<vmem>>) attributes {dimension_semantics = [#tpu.dimension_semantics<parallel>], iteration_bounds = array<i64: 1>, scalar_prefetch = 0 : i64, scratch_operands = 0 : i64, tpu.core_type = #tpu.core_type<tc>, window_params = [{transform_indices = @transform_0, window_bounds = array<i64: 9>}, {transform_indices = @transform_1, window_bounds = array<i64: 2, 8, 128>}, {transform_indices = @transform_2, window_bounds = array<i64: 8, 128>}]} {
    %c0 = arith.constant 0 : index
    %0 = memref.load %arg1[%c0] : memref<9xf32, #tpu.memory_space<smem>>
    %c1 = arith.constant 1 : index
    %1 = memref.load %arg1[%c1] : memref<9xf32, #tpu.memory_space<smem>>
    %c2 = arith.constant 2 : index
    %2 = memref.load %arg1[%c2] : memref<9xf32, #tpu.memory_space<smem>>
    %c3 = arith.constant 3 : index
    %3 = memref.load %arg1[%c3] : memref<9xf32, #tpu.memory_space<smem>>
    %c4 = arith.constant 4 : index
    %4 = memref.load %arg1[%c4] : memref<9xf32, #tpu.memory_space<smem>>
    %c5 = arith.constant 5 : index
    %5 = memref.load %arg1[%c5] : memref<9xf32, #tpu.memory_space<smem>>
    %c6 = arith.constant 6 : index
    %6 = memref.load %arg1[%c6] : memref<9xf32, #tpu.memory_space<smem>>
    %c7 = arith.constant 7 : index
    %7 = memref.load %arg1[%c7] : memref<9xf32, #tpu.memory_space<smem>>
    %c8 = arith.constant 8 : index
    %8 = memref.load %arg1[%c8] : memref<9xf32, #tpu.memory_space<smem>>
    %c0_0 = arith.constant 0 : index
    %c0_1 = arith.constant 0 : index
    %c0_2 = arith.constant 0 : index
    %9 = vector.load %arg2[%c0_0, %c0_1, %c0_2] : memref<2x8x128xf32, #tpu.memory_space<vmem>>, vector<1x8x128xf32>
    %10 = vector.shape_cast %9 : vector<1x8x128xf32> to vector<8x128xf32>
    %c1_3 = arith.constant 1 : index
    %c0_4 = arith.constant 0 : index
    %c0_5 = arith.constant 0 : index
    %11 = vector.load %arg2[%c1_3, %c0_4, %c0_5] : memref<2x8x128xf32, #tpu.memory_space<vmem>>, vector<1x8x128xf32>
    %12 = vector.shape_cast %11 : vector<1x8x128xf32> to vector<8x128xf32>
    %13 = vector.broadcast %0 : f32 to vector<8x128xf32>
    %14 = arith.mulf %10, %13 : vector<8x128xf32>
    %15 = vector.broadcast %1 : f32 to vector<8x128xf32>
    %16 = arith.mulf %12, %15 : vector<8x128xf32>
    %17 = arith.addf %14, %16 : vector<8x128xf32>
    %18 = vector.broadcast %4 : f32 to vector<8x128xf32>
    %19 = arith.addf %17, %18 : vector<8x128xf32>
    %cst = arith.constant 0.000000e+00 : f32
    %20 = vector.broadcast %cst : f32 to vector<8x128xf32>
    %21 = arith.maximumf %19, %20 : vector<8x128xf32>
    %22 = vector.broadcast %2 : f32 to vector<8x128xf32>
    %23 = arith.mulf %10, %22 : vector<8x128xf32>
    %24 = vector.broadcast %3 : f32 to vector<8x128xf32>
    %25 = arith.mulf %12, %24 : vector<8x128xf32>
    %26 = arith.addf %23, %25 : vector<8x128xf32>
    %27 = vector.broadcast %5 : f32 to vector<8x128xf32>
    %28 = arith.addf %26, %27 : vector<8x128xf32>
    %cst_6 = arith.constant 0.000000e+00 : f32
    %29 = vector.broadcast %cst_6 : f32 to vector<8x128xf32>
    %30 = arith.maximumf %28, %29 : vector<8x128xf32>
    %31 = vector.broadcast %6 : f32 to vector<8x128xf32>
    %32 = arith.mulf %21, %31 : vector<8x128xf32>
    %33 = vector.broadcast %7 : f32 to vector<8x128xf32>
    %34 = arith.mulf %30, %33 : vector<8x128xf32>
    %35 = arith.addf %32, %34 : vector<8x128xf32>
    %36 = vector.broadcast %8 : f32 to vector<8x128xf32>
    %37 = arith.addf %35, %36 : vector<8x128xf32>
    %c0_7 = arith.constant 0 : index
    %c0_8 = arith.constant 0 : index
    %38 = vector.load %arg3[%c0_7, %c0_8] : memref<8x128xf32, #tpu.memory_space<vmem>>, vector<8x128xf32>
    tpu.vector_store %arg3[%c0_7, %c0_8], %37 {strides = array<i32>} : memref<8x128xf32, #tpu.memory_space<vmem>>, vector<8x128xf32>,
    return
  }
  func.func @transform_0(%arg0: i32) -> i32 {
    %c0_i32 = arith.constant 0 : i32
    %c0_i32_0 = arith.constant 0 : i32
    return %c0_i32 : i32
  }
  func.func @transform_1(%arg0: i32) -> (i32, i32, i32) {
    %c0_i32 = arith.constant 0 : i32
    %c0_i32_0 = arith.constant 0 : i32
    %c0_i32_1 = arith.constant 0 : i32
    return %c0_i32, %arg0, %c0_i32_0 : i32, i32, i32
  }
  func.func @transform_2(%arg0: i32) -> (i32, i32) {
    %c0_i32 = arith.constant 0 : i32
    %c0_i32_0 = arith.constant 0 : i32
    return %arg0, %c0_i32 : i32, i32
  }
}

</mosaic_0001>

<llo_original>
// kernel: tpu_custom_call.1
$region0: #{tpu_custom_call.1}
  #allocation0 [shape = 'u32[]', space=smem, size = 0x4, offset = 0x4, fixed_abs, tag = 'smem constant byte address 0x4 - core index']
  #allocation1 [shape = 'u32[72,128]{1,0:T(1,128)}', space=vmem, size = 0x9000, scoped, tag = 'internal scratch']
  %s0 = inlined_call_operand.hbm [shape: f32[9], index: 0, kind: input, shape index: {}]
  %s1 = inlined_call_operand.hbm [shape: f32[2,8,128], index: 1, kind: input, shape index: {}]
  %s2 = inlined_call_operand.hbm [shape: f32[8,128], index: 2, kind: output, shape index: {}]
  %s3 = sld [smem:[#allocation0]]
  $region26: #{tpu_custom_call.1} parent=0
    _
  %s5 = ssub.s32 1, %s3
  %s6 = scalar_select 0, %s5, %s3
  $region1: #{tpu_custom_call.1} parent=0
    #allocation2 [shape = 'u8[512]{0}', space=smem, size = 0x200, scoped, tag = 'input window, operand 0, single buffered']
    #allocation3 [shape = 's32[1]{0}', space=sflag, size = 0x4, scoped, tag = 'scoped memory for tpu_custom_call.1']
    #allocation4 [shape = 's32[1]{0}', space=sflag, size = 0x4, scoped, tag = 'scoped memory for tpu_custom_call.1']
    #allocation5 [shape = 's32[1]{0}', space=sflag, size = 0x4, scoped, tag = 'scoped memory for tpu_custom_call.1']
    #allocation6 [shape = 'u8[8192]{0}', space=vmem, size = 0x2000, scoped, tag = 'input window, operand 1, single buffered']
    #allocation7 [shape = 'u8[4096]{0}', space=vmem, size = 0x1000, scoped, tag = 'output window, operand 0, single buffered']
    %7 = vsyncpa [#allocation5], 0
    %8 = vsyncpa [#allocation3], 0
    %9 = vsyncpa [#allocation4], 0
    // Predicated region
    $region2: #{tpu_custom_call.1} parent=1 // pred_check
      _
    $region3: #{tpu_custom_call.1} parent=1 // pred_check_branch
      %11 = sbr.rel (0) target = $region5
    $region4: #{tpu_custom_call.1} parent=1 // pred_region
      %13 = vsyncadd [#allocation5], 0
      %s15 = sshll.u32 %s0, 4
      %s16 = int_to_ptr.hbm [resolvable:$true] %s15
      %18 = dma.hbm_to_smem %s16, 16, [#allocation2], [#allocation5]
    $region5: #{tpu_custom_call.1} parent=1 // pred_fallthru
      _
    // Predicated region
    $region6: #{tpu_custom_call.1} parent=1 // pred_check
      _
    $region7: #{tpu_custom_call.1} parent=1 // pred_check_branch
      %20 = sbr.rel (0) target = $region9
    $region8: #{tpu_custom_call.1} parent=1 // pred_region
      %22 = vsyncadd [#allocation3], 0
      %s23 = sshll.u32 %s1, 4
      %s24 = int_to_ptr.hbm [resolvable:$true] %s23
      %s25 = sshll.u32 [#allocation6], 4
      %s26 = int_to_ptr.vmem [resolvable:$true] %s25
      %31 = dma.hbm_to_vmem [thread:$0]  %s24, 256, %s26, [#allocation3], 128, 128, 8
    $region9: #{tpu_custom_call.1} parent=1 // pred_fallthru
      _
    // Predicated region
    $region10: #{tpu_custom_call.1} parent=1 // pred_check
      _
    $region11: #{tpu_custom_call.1} parent=1 // pred_check_branch
      %33 = sbr.rel (0) target = $region13
    $region12: #{tpu_custom_call.1} parent=1 // pred_region
      %35 = dma.done [#allocation5], 16
    $region13: #{tpu_custom_call.1} parent=1 // pred_fallthru
      _
    // Predicated region
    $region14: #{tpu_custom_call.1} parent=1 // pred_check
      _
    $region15: #{tpu_custom_call.1} parent=1 // pred_check_branch
      %37 = sbr.rel (0) target = $region17
    $region16: #{tpu_custom_call.1} parent=1 // pred_region
      %39 = dma.done [#allocation3], 256
    $region17: #{tpu_custom_call.1} parent=1 // pred_fallthru
      _
    %40 = sfence
    %s41 = sld [smem:[#allocation2]]
    %s42 = sld [smem:[#allocation2 + $0x1]]
    %s43 = sld [smem:[#allocation2 + $0x2]]
    %s44 = sld [smem:[#allocation2 + $0x3]]
    %s45 = sld [smem:[#allocation2 + $0x4]]
    %s46 = sld [smem:[#allocation2 + $0x5]]
    %s47 = sld [smem:[#allocation2 + $0x6]]
    %s48 = sld [smem:[#allocation2 + $0x7]]
    %s49 = sld [smem:[#allocation2 + $0x8]]
    %v50 = vld [vmem:[#allocation6] sm:$0xff]
    %s51 = scalar_lea.vmem [#allocation6], 8
    %v52 = vld [vmem:[%s51] sm:$0xff]
    %v53 = vstv %s41
    %v54 = vmul.f32 %v50, %v53
    %v55 = vstv %s42
    %v56 = vmul.f32 %v52, %v55
    %v57 = vadd.f32 %v54, %v56
    %v58 = vstv %s45
    %v59 = vadd.f32 %v57, %v58
    %v60 = vmax.f32 %v59, 0.0
    %v61 = vstv %s43
    %v62 = vmul.f32 %v50, %v61
    %v63 = vstv %s44
    %v64 = vmul.f32 %v52, %v63
    %v65 = vadd.f32 %v62, %v64
    %v66 = vstv %s46
    %v67 = vadd.f32 %v65, %v66
    %v68 = vmax.f32 %v67, 0.0
    %v69 = vstv %s47
    %v70 = vmul.f32 %v60, %v69
    %v71 = vstv %s48
    %v72 = vmul.f32 %v68, %v71
    %v73 = vadd.f32 %v70, %v72
    %v74 = vstv %s49
    %v75 = vadd.f32 %v73, %v74
    %76 = vst [vmem:[#allocation7] sm:$0xff] %v75
    // Predicated region
    $region18: #{tpu_custom_call.1} parent=1 // pred_check
      _
    $region19: #{tpu_custom_call.1} parent=1 // pred_check_branch
      %78 = sbr.rel (0) target = $region21
    $region20: #{tpu_custom_call.1} parent=1 // pred_region
      %80 = vsyncadd [#allocation4], 0
      %s82 = sshll.u32 [#allocation7], 4
      %s83 = int_to_ptr.vmem [resolvable:$true] %s82
      %s84 = sshll.u32 %s2, 4
      %s85 = int_to_ptr.hbm [resolvable:$true] %s84
      %87 = dma.vmem_to_hbm [thread:$0]  %s83, 128, %s85, [#allocation4]
    $region21: #{tpu_custom_call.1} parent=1 // pred_fallthru
      _
    // Predicated region
    $region22: #{tpu_custom_call.1} parent=1 // pred_check
      _
    $region23: #{tpu_custom_call.1} parent=1 // pred_check_branch
      %89 = sbr.rel (0) target = $region25
    $region24: #{tpu_custom_call.1} parent=1 // pred_region
      %91 = dma.done [#allocation4], 128
    $region25: #{tpu_custom_call.1} parent=1 // pred_fallthru
      _
    %92 = vsyncpa [#allocation3], 1
    %93 = vsyncpa [#allocation4], 1
    %94 = vsyncpa [#allocation5], 1

</llo_original>
